<compile_context>
chip_gen: v6e
topology: v6e:2x2x1
jax: 0.10.0
libtpu: 0.0.40
codegen_flags: <defaults>
</compile_context>

<pallas_src>
import jax
import jax.numpy as jnp
from jax.experimental import pallas as pl
from jax.experimental.pallas import tpu as pltpu


def _round_up(a, b):
    return ((a + b - 1) // b) * b


def _make_upblock_kernel(rm, wp, last):
    tmw = rm * wp

    def upblock_kernel(xm_ref, xn_ref, wl_ref, wh_ref, b_ref, o_ref):
        # xm_ref: (rm, wp, Cin)  xh rows [t*rm, (t+1)*rm) == x[m-1] for every
        #                        super-row m of this tile
        # xn_ref: (wp, Cin)      xh row (t+1)*rm == x[m] for the tile's LAST super-row
        # wl_ref: (Cin, Cpad)    kh in {0,1}, phase-packed, lane-padded
        # wh_ref: (Cin, Cpad)    kh in {2,3}
        # b_ref : (1, Cpad)      bias tiled over the 4 phases (f32)
        # o_ref : (tmw, Cpad)    lane-dense output tile
        cin = xm_ref.shape[-1]
        xm = xm_ref[...].reshape(tmw, cin)   # layout-preserving: wp % 16 == 0
        xn = xn_ref[...]
        wl = wl_ref[...]
        wh = wh_ref[...]
        b = b_ref[...]

        def act(v):
            if last:
                return jax.nn.sigmoid(v)            # nn.Sigmoid()
            return jnp.where(v >= 0, v, 0.2 * v)    # nn.LeakyReLU(0.2)

        # kh in {2,3} term uses x[m-1] -> exactly the main block.
        acc_h = jnp.dot(xm, wh, preferred_element_type=jnp.float32)

        # kh in {0,1} term uses x[m]: rows wp.. of the main block cover all but
        # the last super-row; the extra "next row" block covers the last one.
        # All slice offsets are static multiples of wp (>= 16) -> aligned.
        if rm > 1:
            acc_l = jnp.dot(xm[wp:, :], wl, preferred_element_type=jnp.float32)
            o_ref[: tmw - wp, :] = act(acc_h[: tmw - wp, :] + acc_l + b).astype(o_ref.dtype)
        acc_l_last = jnp.dot(xn, wl, preferred_element_type=jnp.float32)
        o_ref[tmw - wp:, :] = act(acc_h[tmw - wp:, :] + acc_l_last + b).astype(o_ref.dtype)

    return upblock_kernel


def upblock_forward(x_nchw, weight, bias, *, last=False, norm=False,
                    compute_dtype=jnp.bfloat16, out_dtype=None,
                    vmem_budget_bytes=24 << 20):
    """x_nchw: (N, Cin, H, W); weight: (Cin, Cout, 4, 2); bias: (Cout,)."""
    # TODO(synk): norm=True (training-mode BatchNorm2d) not implemented; module default is norm=False.
    assert not norm
    N, Cin, H, W = x_nchw.shape
    Cin_w, Cout, KH, KW = weight.shape
    assert (Cin_w, KH, KW) == (Cin, 4, 2)
    if out_dtype is None:
        out_dtype = x_nchw.dtype

    Ho, Wo = 2 * H + 2, 2 * W
    Mrows = H + 1                               # output "super-rows" m
    Wp = _round_up(W, 16)                       # padded row width -> aligned offsets
    Cval = 4 * Cout                             # packed (r, s, co) output columns
    Cpad = max(128, _round_up(Cval, 128))       # lane-dense output width

    # ---- row-tile size from an explicit VMEM budget (bigger tiles, bounded) ----
    csize = jnp.dtype(compute_dtype).itemsize
    cin_lanes = _round_up(max(Cin, 128), 128)           # lane-padded VMEM footprint
    per_row = Wp * (2 * cin_lanes * csize               # activation block (2 buffers)
                    + 2 * Cpad * csize                  # output block (2 buffers)
                    + 3 * Cpad * 4)                     # f32 accumulators / intermediates
    fixed = (2 * 2 * _round_up(Cin, 16) * Cpad * csize  # wl + wh (2 buffers each)
             + 2 * Wp * cin_lanes * csize               # "next row" halo block
             + 2 * 8 * Cpad * 4)                        # bias
    if vmem_budget_bytes > fixed + per_row:
        rm_budget = (vmem_budget_bytes - fixed) // per_row
    else:
        rm_budget = 1
    rm_cap = max(1, 2048 // Wp)                         # <= ~2048 flattened rows / tile
    RM = int(min(Mrows, rm_budget, rm_cap))             # image rows per grid step
    nt = -(-Mrows // RM)
    Mr = nt * RM                                        # padded super-row count
    TMW = RM * Wp                                       # flattened rows per output tile

    vmem_limit = int(min(64 << 20,
                         max(int((fixed + per_row * RM) * 1.25) + (2 << 20), 16 << 20)))

    # ---- packed activations: xh[n, r] = x[n, r-1] (zero outside valid range) ----
    x_nhwc = jnp.transpose(x_nchw, (0, 2, 3, 1)).astype(compute_dtype)     # (N, H, W, Cin)
    xh = jnp.pad(x_nhwc, ((0, 0), (1, Mr - H), (0, Wp - W), (0, 0)))       # (N, Mr+1, Wp, Cin)

    # ---- phase-packed, lane-padded weights / bias: col = (r*2 + s)*Cout + co ----
    wl = jnp.transpose(weight[:, :, :2, :], (0, 2, 3, 1)).reshape(Cin, Cval)   # kh = r
    wh = jnp.transpose(weight[:, :, 2:, :], (0, 2, 3, 1)).reshape(Cin, Cval)   # kh = r + 2
    pad_c = Cpad - Cval
    wl = jnp.pad(wl, ((0, 0), (0, pad_c))).astype(compute_dtype)
    wh = jnp.pad(wh, ((0, 0), (0, pad_c))).astype(compute_dtype)
    b2d = jnp.pad(jnp.tile(bias, 4), (0, pad_c)).reshape(1, Cpad).astype(jnp.float32)

    kernel = _make_upblock_kernel(RM, Wp, last)
    y = pl.pallas_call(
        kernel,
        out_shape=jax.ShapeDtypeStruct((N, Mr * Wp, Cpad), compute_dtype),
        grid_spec=pltpu.PrefetchScalarGridSpec(
            num_scalar_prefetch=0,
            grid=(N, nt),
            in_specs=[
                # main halo block: xh rows [t*RM, (t+1)*RM) == x rows [t*RM-1, (t+1)*RM-1)
                pl.BlockSpec((None, RM, Wp, Cin), lambda n, t: (n, t, 0, 0)),
                # one extra image row (xh row (t+1)*RM): x[m] for the tile's last super-row
                pl.BlockSpec((None, None, Wp, Cin), lambda n, t: (n, (t + 1) * RM, 0, 0)),
                # grid-constant weights / bias (fetched once, stay resident)
                pl.BlockSpec((Cin, Cpad), lambda n, t: (0, 0)),
                pl.BlockSpec((Cin, Cpad), lambda n, t: (0, 0)),
                pl.BlockSpec((1, Cpad), lambda n, t: (0, 0)),
            ],
            out_specs=pl.BlockSpec((None, TMW, Cpad), lambda n, t: (n, t, 0)),
        ),
        compiler_params=pltpu.CompilerParams(
            dimension_semantics=("parallel", "parallel"),
            vmem_limit_bytes=vmem_limit),
    )(xh, xh, wl, wh, b2d)

    # ---- glue: strip padding, de-interleave phases, back to NCHW ----
    # TODO(synk): when chaining UpBlocks keep the packed layout and fuse this into
    # the next block's input packing instead of materializing NCHW here.
    y = y[:, : Mrows * Wp, :Cval]
    y = y.reshape(N, Mrows, Wp, 2, 2, Cout)[:, :, :W]      # (n, m, j, r, s, co)
    y = jnp.transpose(y, (0, 1, 3, 2, 4, 5))               # (n, m, r, j, s, co)
    y = y.reshape(N, Ho, Wo, Cout)                         # (n, 2m+r, 2j+s, co)
    return jnp.transpose(y, (0, 3, 1, 2)).astype(out_dtype)   # NCHW


def upblock_reference(x_nchw, weight, bias, *, last=False):
    """Pure-JAX reference: ConvTranspose2d as lhs-dilated conv with flipped kernel."""
    Cin, Cout, KH, KW = weight.shape
    w_conv = jnp.transpose(weight, (1, 0, 2, 3))[:, :, ::-1, ::-1]     # (Cout,Cin,KH,KW)
    y = jax.lax.conv_general_dilated(
        x_nchw, w_conv,
        window_strides=(1, 1),
        padding=((KH - 1, KH - 1), (KW - 1, KW - 1)),
        lhs_dilation=(2, 2),
        rhs_dilation=(1, 1),
        dimension_numbers=("NCHW", "OIHW", "NCHW"),
    ) + bias[None, :, None, None]
    if last:
        return jax.nn.sigmoid(y)
    return jnp.where(y >= 0, y, 0.2 * y)


if __name__ == "__main__":
    key = jax.random.PRNGKey(0)
    k_x, k_w, k_b = jax.random.split(key, 3)

    N, Cin, Cout, H, W = 2, 4, 8, 16, 16
    KH, KW = 4, 2

    x = jax.random.normal(k_x, (N, Cin, H, W), dtype=jnp.float32)
    # PyTorch-style init scale for ConvTranspose2d: U(-1/sqrt(fan), 1/sqrt(fan))
    fan = Cin * KH * KW
    bound = 1.0 / (fan ** 0.5)
    weight = jax.random.uniform(k_w, (Cin, Cout, KH, KW), jnp.float32, -bound, bound)
    bias = jax.random.uniform(k_b, (Cout,), jnp.float32, -bound, bound)

    ref = upblock_reference(x, weight, bias, last=False)

    # 1) exactness check: f32 compute path
    out_f32 = jax.block_until_ready(
        upblock_forward(x, weight, bias, last=False, compute_dtype=jnp.float32))
    assert out_f32.shape == (N, Cout, 2 * H + 2, 2 * W), out_f32.shape
    assert jnp.allclose(out_f32, ref, atol=1e-4, rtol=1e-4), \
        float(jnp.max(jnp.abs(out_f32 - ref)))

    # 2) fast path: bf16 activations/weights, f32 MXU accumulation
    out_bf16 = jax.block_until_ready(upblock_forward(x, weight, bias, last=False))
    assert out_bf16.shape == ref.shape
    assert jnp.allclose(out_bf16, ref, atol=5e-2, rtol=5e-2), \
        float(jnp.max(jnp.abs(out_bf16 - ref)))

    # 3) sigmoid ("last") variant
    ref_last = upblock_reference(x, weight, bias, last=True)
    out_last = jax.block_until_ready(
        upblock_forward(x, weight, bias, last=True, compute_dtype=jnp.float32))
    assert jnp.allclose(out_last, ref_last, atol=1e-4, rtol=1e-4), \
        float(jnp.max(jnp.abs(out_last - ref_last)))

    # 4) multi-tile path (force several row tiles so the halo BlockSpec is exercised)
    out_tiled = jax.block_until_ready(
        upblock_forward(x, weight, bias, last=False, compute_dtype=jnp.float32,
                        vmem_budget_bytes=1 << 19))
    assert jnp.allclose(out_tiled, ref, atol=1e-4, rtol=1e-4), \
        float(jnp.max(jnp.abs(out_tiled - ref)))

    print("KERNEL_OK")
</pallas_src>

<mosaic_0001>
module attributes {stable_mosaic.version = 11 : i64} {
  func.func @upblock_kernel(%arg0: i32, %arg1: i32, %arg2: memref<1x17x16x4xf32, #tpu.memory_space<vmem>>, %arg3: memref<1x1x16x4xf32, #tpu.memory_space<vmem>>, %arg4: memref<4x128xf32, #tpu.memory_space<vmem>>, %arg5: memref<4x128xf32, #tpu.memory_space<vmem>>, %arg6: memref<1x128xf32, #tpu.memory_space<vmem>>, %arg7: memref<1x272x128xf32, #tpu.memory_space<vmem>>) attributes {dimension_semantics = [#tpu.dimension_semantics<parallel>, #tpu.dimension_semantics<parallel>], iteration_bounds = array<i64: 2, 1>, scalar_prefetch = 0 : i64, scratch_operands = 0 : i64, tpu.core_type = #tpu.core_type<tc>, window_params = [{transform_indices = @transform_0, window_bounds = array<i64: 1, 17, 16, 4>}, {transform_indices = @transform_1, window_bounds = array<i64: 1, 1, 16, 4>}, {pipeline_mode = #tpu.pipeline_mode<synchronous>, transform_indices = @transform_2, window_bounds = array<i64: 4, 128>}, {pipeline_mode = #tpu.pipeline_mode<synchronous>, transform_indices = @transform_3, window_bounds = array<i64: 4, 128>}, {pipeline_mode = #tpu.pipeline_mode<synchronous>, transform_indices = @transform_4, window_bounds = array<i64: 1, 128>}, {transform_indices = @transform_5, window_bounds = array<i64: 1, 272, 128>}]} {
    %c0 = arith.constant 0 : index
    %c0_0 = arith.constant 0 : index
    %c0_1 = arith.constant 0 : index
    %c0_2 = arith.constant 0 : index
    %0 = vector.load %arg2[%c0, %c0_0, %c0_1, %c0_2] : memref<1x17x16x4xf32, #tpu.memory_space<vmem>>, vector<1x17x16x4xf32>
    %1 = vector.shape_cast %0 : vector<1x17x16x4xf32> to vector<17x16x4xf32>
    %2 = vector.shape_cast %1 : vector<17x16x4xf32> to vector<272x4xf32>
    %c0_3 = arith.constant 0 : index
    %c0_4 = arith.constant 0 : index
    %c0_5 = arith.constant 0 : index
    %c0_6 = arith.constant 0 : index
    %3 = vector.load %arg3[%c0_3, %c0_4, %c0_5, %c0_6] : memref<1x1x16x4xf32, #tpu.memory_space<vmem>>, vector<1x1x16x4xf32>
    %4 = vector.shape_cast %3 : vector<1x1x16x4xf32> to vector<16x4xf32>
    %c0_7 = arith.constant 0 : index
    %c0_8 = arith.constant 0 : index
    %5 = vector.load %arg4[%c0_7, %c0_8] : memref<4x128xf32, #tpu.memory_space<vmem>>, vector<4x128xf32>
    %c0_9 = arith.constant 0 : index
    %c0_10 = arith.constant 0 : index
    %6 = vector.load %arg5[%c0_9, %c0_10] : memref<4x128xf32, #tpu.memory_space<vmem>>, vector<4x128xf32>
    %c0_11 = arith.constant 0 : index
    %c0_12 = arith.constant 0 : index
    %7 = vector.load %arg6[%c0_11, %c0_12] : memref<1x128xf32, #tpu.memory_space<vmem>>, vector<1x128xf32>
    %cst = arith.constant dense<0.000000e+00> : vector<272x128xf32>
    %8 = tpu.matmul %2, %6, %cst {dimension_numbers = #tpu.dot_dimension_numbers<[1], [0], [0], [1], [0, 0, 1, 1], [], []>} : vector<272x4xf32>, vector<4x128xf32>, vector<272x128xf32> -> vector<272x128xf32>
    %9 = vector.extract_strided_slice %2 {offsets = [16, 0], sizes = [256, 4], strides = [1, 1]} : vector<272x4xf32> to vector<256x4xf32>
    %cst_13 = arith.constant dense<0.000000e+00> : vector<256x128xf32>
    %10 = tpu.matmul %9, %5, %cst_13 {dimension_numbers = #tpu.dot_dimension_numbers<[1], [0], [0], [1], [0, 0, 1, 1], [], []>} : vector<256x4xf32>, vector<4x128xf32>, vector<256x128xf32> -> vector<256x128xf32>
    %11 = vector.extract_strided_slice %8 {offsets = [0, 0], sizes = [256, 128], strides = [1, 1]} : vector<272x128xf32> to vector<256x128xf32>
    %12 = arith.addf %11, %10 : vector<256x128xf32>
    %13 = vector.broadcast %7 : vector<1x128xf32> to vector<256x128xf32>
    %14 = arith.addf %12, %13 : vector<256x128xf32>
    %cst_14 = arith.constant 0.000000e+00 : f32
    %15 = vector.broadcast %cst_14 : f32 to vector<256x128xf32>
    %16 = arith.cmpf oge, %14, %15 : vector<256x128xf32>
    %cst_15 = arith.constant 2.000000e-01 : f32
    %17 = vector.broadcast %cst_15 : f32 to vector<256x128xf32>
    %18 = arith.mulf %17, %14 : vector<256x128xf32>
    %19 = arith.select %16, %14, %18 : vector<256x128xi1>, vector<256x128xf32>
    %c0_16 = arith.constant 0 : index
    %c0_17 = arith.constant 0 : index
    %c0_18 = arith.constant 0 : index
    %20 = vector.load %arg7[%c0_16, %c0_17, %c0_18] : memref<1x272x128xf32, #tpu.memory_space<vmem>>, vector<1x256x128xf32>
    %21 = vector.shape_cast %20 : vector<1x256x128xf32> to vector<256x128xf32>
    %22 = vector.shape_cast %19 : vector<256x128xf32> to vector<1x256x128xf32>
    tpu.vector_store %arg7[%c0_16, %c0_17, %c0_18], %22 {strides = array<i32>} : memref<1x272x128xf32, #tpu.memory_space<vmem>>, vector<1x256x128xf32>,
    %cst_19 = arith.constant dense<0.000000e+00> : vector<16x128xf32>
    %23 = tpu.matmul %4, %5, %cst_19 {dimension_numbers = #tpu.dot_dimension_numbers<[1], [0], [0], [1], [0, 0, 1, 1], [], []>} : vector<16x4xf32>, vector<4x128xf32>, vector<16x128xf32> -> vector<16x128xf32>
    %24 = vector.extract_strided_slice %8 {offsets = [256, 0], sizes = [16, 128], strides = [1, 1]} : vector<272x128xf32> to vector<16x128xf32>
    %25 = arith.addf %24, %23 : vector<16x128xf32>
    %26 = vector.broadcast %7 : vector<1x128xf32> to vector<16x128xf32>
    %27 = arith.addf %25, %26 : vector<16x128xf32>
    %cst_20 = arith.constant 0.000000e+00 : f32
    %28 = vector.broadcast %cst_20 : f32 to vector<16x128xf32>
    %29 = arith.cmpf oge, %27, %28 : vector<16x128xf32>
    %cst_21 = arith.constant 2.000000e-01 : f32
    %30 = vector.broadcast %cst_21 : f32 to vector<16x128xf32>
    %31 = arith.mulf %30, %27 : vector<16x128xf32>
    %32 = arith.select %29, %27, %31 : vector<16x128xi1>, vector<16x128xf32>
    %c0_22 = arith.constant 0 : index
    %c256 = arith.constant 256 : index
    %c0_23 = arith.constant 0 : index
    %33 = vector.load %arg7[%c0_22, %c256, %c0_23] : memref<1x272x128xf32, #tpu.memory_space<vmem>>, vector<1x16x128xf32>
    %34 = vector.shape_cast %33 : vector<1x16x128xf32> to vector<16x128xf32>
    %35 = vector.shape_cast %32 : vector<16x128xf32> to vector<1x16x128xf32>
    tpu.vector_store %arg7[%c0_22, %c256, %c0_23], %35 {strides = array<i32>} : memref<1x272x128xf32, #tpu.memory_space<vmem>>, vector<1x16x128xf32>,
    return
  }
  func.func @transform_0(%arg0: i32, %arg1: i32) -> (i32, i32, i32, i32) {
    %c0_i32 = arith.constant 0 : i32
    %c0_i32_0 = arith.constant 0 : i32
    %c0_i32_1 = arith.constant 0 : i32
    return %arg0, %arg1, %c0_i32, %c0_i32_0 : i32, i32, i32, i32
  }
  func.func @transform_1(%arg0: i32, %arg1: i32) -> (i32, i32, i32, i32) {
    %c1_i32 = arith.constant 1 : i32
    %0 = arith.addi %arg1, %c1_i32 : i32
    %c17_i32 = arith.constant 17 : i32
    %1 = arith.muli %0, %c17_i32 : i32
    %c0_i32 = arith.constant 0 : i32
    %c0_i32_0 = arith.constant 0 : i32
    %c0_i32_1 = arith.constant 0 : i32
    return %arg0, %1, %c0_i32, %c0_i32_0 : i32, i32, i32, i32
  }
  func.func @transform_2(%arg0: i32, %arg1: i32) -> (i32, i32) {
    %c0_i32 = arith.constant 0 : i32
    %c0_i32_0 = arith.constant 0 : i32
    %c0_i32_1 = arith.constant 0 : i32
    return %c0_i32, %c0_i32_0 : i32, i32
  }
  func.func @transform_3(%arg0: i32, %arg1: i32) -> (i32, i32) {
    %c0_i32 = arith.constant 0 : i32
    %c0_i32_0 = arith.constant 0 : i32
    %c0_i32_1 = arith.constant 0 : i32
    return %c0_i32, %c0_i32_0 : i32, i32
  }
  func.func @transform_4(%arg0: i32, %arg1: i32) -> (i32, i32) {
    %c0_i32 = arith.constant 0 : i32
    %c0_i32_0 = arith.constant 0 : i32
    %c0_i32_1 = arith.constant 0 : i32
    return %c0_i32, %c0_i32_0 : i32, i32
  }
  func.func @transform_5(%arg0: i32, %arg1: i32) -> (i32, i32, i32) {
    %c0_i32 = arith.constant 0 : i32
    %c0_i32_0 = arith.constant 0 : i32
    return %arg0, %arg1, %c0_i32 : i32, i32, i32
  }
}

</mosaic_0001>

<llo_original>
// kernel: tpu_custom_call.1
$region0: #{tpu_custom_call.1}
  #allocation0 [shape = 'u32[]', space=smem, size = 0x4, offset = 0x4, fixed_abs, tag = 'smem constant byte address 0x4 - core index']
  #allocation1 [shape = 'u32[144,128]{1,0:T(1,128)}', space=vmem, size = 0x12000, scoped, tag = 'internal scratch']
  %s0 = inlined_call_operand.vmem [shape: f32[2,18,16,4], index: 0, kind: input, shape index: {}]
  %s1 = inlined_call_operand.vmem [shape: f32[2,18,16,4], index: 1, kind: input, shape index: {}]
  %s2 = inlined_call_operand.vmem [shape: f32[4,128], index: 2, kind: input, shape index: {}]
  %s3 = inlined_call_operand.vmem [shape: f32[4,128], index: 3, kind: input, shape index: {}]
  %s4 = inlined_call_operand.vmem [shape: f32[1,128], index: 4, kind: input, shape index: {}]
  %s5 = inlined_call_operand.hbm [shape: f32[2,272,128], index: 5, kind: output, shape index: {}]
  %s6 = sld [smem:[#allocation0]]
  $region53: #{tpu_custom_call.1} parent=0
    _
  %s8 = ssub.s32 1, %s6
  %s9 = scalar_select 0, %s8, %s6
  $region1: #{tpu_custom_call.1} parent=0
    #allocation2 [shape = 'u8[278528]{0}', space=vmem, size = 0x44000, scoped, tag = 'output window, operand 0']
    #allocation3 [shape = 's32[2]{0}', space=sflag, size = 0x8, scoped, tag = 'scoped memory for tpu_custom_call.1']
    %10 = vsyncpa [#allocation3], 0
    %s11 = scalar_lea.sflag [#allocation3], 1
    %12 = vsyncpa %s11, 0
    loop: start=0, step=1, limit=4
    $region2: #{tpu_custom_call.1} parent=1 // loop_pre_header
      _
    $region3: #{tpu_custom_call.1} parent=1 // loop_header
      %s14 = sphi 0, %s18
      %p15 = scmp.ge.s32.totalorder %s14, 4
      %s21 = sphi 0, %s33
      %s22 = sphi 0, %s29
      %s23 = sphi 0, %s21
      %s24 = sphi 0, %s22
      %s25 = sphi 0, %s23
      %s26 = sphi 0, %s24
      %s38 = sphi 0, %s40
      %s41 = sphi 0, %s38
      %s42 = sphi 0, %s41
      %s58 = sphi 0, %s42
      %s70 = sphi 0, %s72
      %s73 = sphi 0, %s70
      %s74 = sphi 0, %s73
      %s90 = sphi 0, %s74
      %s94 = sphi 0, %s94
      %s96 = sphi 0, %s94
      %s97 = sphi 0, %s96
      %s111 = sphi 0, %s97
      %s115 = sphi 0, %s115
      %s117 = sphi 0, %s115
      %s118 = sphi 0, %s117
      %s132 = sphi 0, %s118
      %s136 = sphi 0, %s136
      %s138 = sphi 0, %s136
      %s139 = sphi 0, %s138
      %s153 = sphi 0, %s139
      %s161 = sphi 0, %s163
      %s164 = sphi 0, %s161
      %s165 = sphi 0, %s164
      %s181 = sphi 0, %s165
    $region4: #{tpu_custom_call.1} parent=1 // loop_header_branch
      %17 = sbr.rel (%p15) target = $region8
    $region5: #{tpu_custom_call.1} parent=1 // loop_body
      %s19 = ssub.s32 %s14, 1
      %s20 = ssub.s32 %s14, 2
      %s27 = sadd.s32 1, %s22
      %p28 = scmp.ge.s32.totalorder %s27, 1
      %s29 = scalar_select %p28, 0, %s27
      %s30 = sadd.s32 1, %s21
      %s31 = scalar_select %p28, %s30, %s21
      %p32 = scmp.ge.s32.totalorder %s31, 2
      %s33 = scalar_select %p32, 0, %s31
      %s34 = ssub.s32 %s21, %s33
      %s35 = ssub.s32 %s22, %s29
      %s36 = sor.u32 %s34, %s35
      %p37 = scmp.eq.s32.totalorder %s36, 0
      %s39 = sadd.s32 %s38, 1
      %s40 = scalar_select %p37, %s38, %s39
      %p43 = pneg %p37
      %p44 = scmp.eq.s32.totalorder %s14, 1
      %p45 = por %p43, %p44
      %p46 = scmp.ne.s32.totalorder %s38, %s41
      %p47 = scmp.eq.s32.totalorder %s14, 0
      %p48 = por %p46, %p47
      %p49 = scmp.ne.s32.totalorder %s38, %s41
      %p50 = scmp.eq.s32.totalorder %s19, 1
      %p51 = por %p49, %p50
      %p52 = scmp.ne.s32.totalorder %s41, %s42
      %p53 = scmp.eq.s32.totalorder %s19, 0
      %p54 = por %p52, %p53
      %p55 = scmp.ne.s32.totalorder %s41, %s42
      %p56 = scmp.eq.s32.totalorder %s20, 1
      %p57 = por %p55, %p56
      %p59 = scmp.ne.s32.totalorder %s42, %s58
      %p60 = scmp.eq.s32.totalorder %s20, 0
      %p61 = por %p59, %p60
      %s62 = sadd.s32 %s22, 1
      %s63 = smul.u32 %s62, 17
      %s64 = sadd.s32 %s29, 1
      %s65 = smul.u32 %s64, 17
      %s66 = ssub.s32 %s21, %s33
      %s67 = ssub.s32 %s63, %s65
      %s68 = sor.u32 %s66, %s67
      %p69 = scmp.eq.s32.totalorder %s68, 0
      %s71 = sadd.s32 %s70, 1
      %s72 = scalar_select %p69, %s70, %s71
      %p75 = pneg %p69
      %p76 = scmp.eq.s32.totalorder %s14, 1
      %p77 = por %p75, %p76
      %p78 = scmp.ne.s32.totalorder %s70, %s73
      %p79 = scmp.eq.s32.totalorder %s14, 0
      %p80 = por %p78, %p79
      %p81 = scmp.ne.s32.totalorder %s70, %s73
      %p82 = scmp.eq.s32.totalorder %s19, 1
      %p83 = por %p81, %p82
      %p84 = scmp.ne.s32.totalorder %s73, %s74
      %p85 = scmp.eq.s32.totalorder %s19, 0
      %p86 = por %p84, %p85
      %p87 = scmp.ne.s32.totalorder %s73, %s74
      %p88 = scmp.eq.s32.totalorder %s20, 1
      %p89 = por %p87, %p88
      %p91 = scmp.ne.s32.totalorder %s74, %s90
      %p92 = scmp.eq.s32.totalorder %s20, 0
      %p93 = por %p91, %p92
      %s95 = sadd.s32 %s94, 1
      %p98 = scmp.eq.s32.totalorder %s14, 1
      %p99 = scmp.ne.s32.totalorder %s94, %s96
      %p100 = scmp.eq.s32.totalorder %s14, 0
      %p101 = por %p99, %p100
      %p102 = scmp.ne.s32.totalorder %s94, %s96
      %p103 = scmp.eq.s32.totalorder %s19, 1
      %p104 = por %p102, %p103
      %p105 = scmp.ne.s32.totalorder %s96, %s97
      %p106 = scmp.eq.s32.totalorder %s19, 0
      %p107 = por %p105, %p106
      %p108 = scmp.ne.s32.totalorder %s96, %s97
      %p109 = scmp.eq.s32.totalorder %s20, 1
      %p110 = por %p108, %p109
      %p112 = scmp.ne.s32.totalorder %s97, %s111
      %p113 = scmp.eq.s32.totalorder %s20, 0
      %p114 = por %p112, %p113
      %s116 = sadd.s32 %s115, 1
      %p119 = scmp.eq.s32.totalorder %s14, 1
      %p120 = scmp.ne.s32.totalorder %s115, %s117
      %p121 = scmp.eq.s32.totalorder %s14, 0
      %p122 = por %p120, %p121
      %p123 = scmp.ne.s32.totalorder %s115, %s117
      %p124 = scmp.eq.s32.totalorder %s19, 1
      %p125 = por %p123, %p124
      %p126 = scmp.ne.s32.totalorder %s117, %s118
      %p127 = scmp.eq.s32.totalorder %s19, 0
      %p128 = por %p126, %p127
      %p129 = scmp.ne.s32.totalorder %s117, %s118
      %p130 = scmp.eq.s32.totalorder %s20, 1
      %p131 = por %p129, %p130
      %p133 = scmp.ne.s32.totalorder %s118, %s132
      %p134 = scmp.eq.s32.totalorder %s20, 0
      %p135 = por %p133, %p134
      %s137 = sadd.s32 %s136, 1
      %p140 = scmp.eq.s32.totalorder %s14, 1
      %p141 = scmp.ne.s32.totalorder %s136, %s138
      %p142 = scmp.eq.s32.totalorder %s14, 0
      %p143 = por %p141, %p142
      %p144 = scmp.ne.s32.totalorder %s136, %s138
      %p145 = scmp.eq.s32.totalorder %s19, 1
      %p146 = por %p144, %p145
      %p147 = scmp.ne.s32.totalorder %s138, %s139
      %p148 = scmp.eq.s32.totalorder %s19, 0
      %p149 = por %p147, %p148
      %p150 = scmp.ne.s32.totalorder %s138, %s139
      %p151 = scmp.eq.s32.totalorder %s20, 1
      %p152 = por %p150, %p151
      %p154 = scmp.ne.s32.totalorder %s139, %s153
      %p155 = scmp.eq.s32.totalorder %s20, 0
      %p156 = por %p154, %p155
      %s157 = ssub.s32 %s21, %s33
      %s158 = ssub.s32 %s22, %s29
      %s159 = sor.u32 %s157, %s158
      %p160 = scmp.eq.s32.totalorder %s159, 0
      %s162 = sadd.s32 %s161, 1
      %s163 = scalar_select %p160, %s161, %s162
      %p166 = pneg %p160
      %p167 = scmp.eq.s32.totalorder %s14, 1
      %p168 = por %p166, %p167
      %p169 = scmp.ne.s32.totalorder %s161, %s164
      %p170 = scmp.eq.s32.totalorder %s14, 0
      %p171 = por %p169, %p170
      %p172 = scmp.ne.s32.totalorder %s161, %s164
      %p173 = scmp.eq.s32.totalorder %s19, 1
      %p174 = por %p172, %p173
      %p175 = scmp.ne.s32.totalorder %s164, %s165
      %p176 = scmp.eq.s32.totalorder %s19, 0
      %p177 = por %p175, %p176
      %p178 = scmp.ne.s32.totalorder %s164, %s165
      %p179 = scmp.eq.s32.totalorder %s20, 1
      %p180 = por %p178, %p179
      %p182 = scmp.ne.s32.totalorder %s165, %s181
      %p183 = scmp.eq.s32.totalorder %s20, 0
      %p184 = por %p182, %p183
      %p185 = scmp.le.s32.totalorder 1, %s14
      %p186 = scmp.lt.s32.totalorder %s14, 3
      %p187 = pnand %p185, %p186
      %p188 = pneg %p187
      // Predicated region
      $region9: #{tpu_custom_call.1} parent=5 // pred_check
        _
      $region10: #{tpu_custom_call.1} parent=5 // pred_check_branch
        %190 = sbr.rel (%p187) target = $region12
      $region11: #{tpu_custom_call.1} parent=5 // pred_region
        %s191 = ssub.s32 %s14, 1
        // Predicated region
        $region13: #{tpu_custom_call.1} parent=11 // pred_check
          %p192 = pneg %p107
        $region14: #{tpu_custom_call.1} parent=11 // pred_check_branch
          %194 = sbr.rel (%p192) target = $region16
        $region15: #{tpu_custom_call.1} parent=11 // pred_region
          _
        $region16: #{tpu_custom_call.1} parent=11 // pred_fallthru
          _
        // Predicated region
        $region17: #{tpu_custom_call.1} parent=11 // pred_check
          %p195 = pneg %p128
        $region18: #{tpu_custom_call.1} parent=11 // pred_check_branch
          %197 = sbr.rel (%p195) target = $region20
        $region19: #{tpu_custom_call.1} parent=11 // pred_region
          _
        $region20: #{tpu_custom_call.1} parent=11 // pred_fallthru
          _
        // Predicated region
        $region21: #{tpu_custom_call.1} parent=11 // pred_check
          %p198 = pneg %p149
        $region22: #{tpu_custom_call.1} parent=11 // pred_check_branch
          %200 = sbr.rel (%p198) target = $region24
        $region23: #{tpu_custom_call.1} parent=11 // pred_region
          _
        $region24: #{tpu_custom_call.1} parent=11 // pred_fallthru
          _
      $region12: #{tpu_custom_call.1} parent=5 // pred_fallthru
        _
      %p201 = scmp.lt.s32.totalorder %s14, 2
      // Predicated region
      $region25: #{tpu_custom_call.1} parent=5 // pred_check
        %p202 = pneg %p201
      $region26: #{tpu_custom_call.1} parent=5 // pred_check_branch
        %204 = sbr.rel (%p202) target = $region28
      $region27: #{tpu_custom_call.1} parent=5 // pred_region
        // Predicated region
        $region29: #{tpu_custom_call.1} parent=27 // pred_check
          %p205 = pneg %p48
        $region30: #{tpu_custom_call.1} parent=27 // pred_check_branch
          %207 = sbr.rel (%p205) target = $region32
        $region31: #{tpu_custom_call.1} parent=27 // pred_region
          %s208 = smul.u32 17, %s22
          %s209 = ssub.s32 18, %s208
          %p210 = scmp.lt.s32.totalorder %s209, 17
          %s211 = scalar_select %p210, %s209, 17
          %s212 = smul.u32 128, %s211
          %s213 = smul.u32 %s212, 2
          %p214 = scmp.lt.s32.totalorder %s21, 1
          %s215 = scalar_select %p214, %s21, 1
          %p216 = scmp.lt.s32.totalorder %s208, 17
          %s217 = scalar_select %p216, %s208, 17
          %s218 = smul.addr %s217, 2
          %s219 = smul.addr %s215, 36
          %s220 = sadd.s32 %s218, %s219
          %s221 = smul.addr %s220, 8
          %s222 = scalar_lea.vmem %s0, %s221
          %s223 = smul.u32 17, %s22
          %s224 = ssub.s32 18, %s223
          %p225 = scmp.lt.s32.totalorder %s224, 17
          %s226 = scalar_select %p225, %s224, 17
          %s227 = smul.u32 128, %s226
          %s228 = smul.u32 %s227, 2
        $region32: #{tpu_custom_call.1} parent=27 // pred_fallthru
          _
        // Predicated region
        $region33: #{tpu_custom_call.1} parent=27 // pred_check
          %p229 = pneg %p80
        $region34: #{tpu_custom_call.1} parent=27 // pred_check_branch
          %231 = sbr.rel (%p229) target = $region36
        $region35: #{tpu_custom_call.1} parent=27 // pred_region
          %s232 = sadd.s32 %s22, 1
          %s233 = smul.u32 %s232, 17
          %p234 = scmp.lt.s32.totalorder %s21, 1
          %s235 = scalar_select %p234, %s21, 1
          %p236 = scmp.lt.s32.totalorder %s233, 17
          %s237 = scalar_select %p236, %s233, 17
          %s238 = smul.addr %s237, 2
          %s239 = smul.addr %s235, 36
          %s240 = sadd.s32 %s238, %s239
          %s241 = smul.addr %s240, 8
          %s242 = scalar_lea.vmem %s1, %s241
          %s243 = sadd.s32 %s22, 1
          %s244 = smul.u32 %s243, 17
        $region36: #{tpu_custom_call.1} parent=27 // pred_fallthru
          _
      $region28: #{tpu_custom_call.1} parent=5 // pred_fallthru
        _
      %p245 = scmp.le.s32.totalorder 1, %s14
      %p246 = scmp.lt.s32.totalorder %s14, 3
      %p247 = pnand %p245, %p246
      %p248 = pneg %p247
      // Predicated region
      $region37: #{tpu_custom_call.1} parent=5 // pred_check
        _
      $region38: #{tpu_custom_call.1} parent=5 // pred_check_branch
        %250 = sbr.rel (%p247) target = $region40
      $region39: #{tpu_custom_call.1} parent=5 // pred_region
        %s251 = ssub.s32 %s14, 1
        %s252 = smul.u32 17, %s24
        %s253 = ssub.s32 18, %s252
        %p254 = scmp.lt.s32.totalorder %s253, 17
        %s255 = scalar_select %p254, %s253, 17
        %s256 = smul.u32 128, %s255
        %s257 = smul.u32 %s256, 2
        %p258 = scmp.lt.s32.totalorder %s23, 1
        %s259 = scalar_select %p258, %s23, 1
        %p260 = scmp.lt.s32.totalorder %s252, 17
        %s261 = scalar_select %p260, %s252, 17
        %s262 = smul.addr %s261, 2
        %s263 = smul.addr %s259, 36
        %s264 = sadd.s32 %s262, %s263
        %s265 = smul.addr %s264, 8
        %s266 = scalar_lea.vmem %s0, %s265
        %p267 = pneg %p54
        %p268 = pneg %p51
        %s269 = sadd.s32 %s24, 1
        %s270 = smul.u32 %s269, 17
        %p271 = scmp.lt.s32.totalorder %s23, 1
        %s272 = scalar_select %p271, %s23, 1
        %p273 = scmp.lt.s32.totalorder %s270, 17
        %s274 = scalar_select %p273, %s270, 17
        %s275 = smul.addr %s274, 2
        %s276 = smul.addr %s272, 36
        %s277 = sadd.s32 %s275, %s276
        %s278 = smul.addr %s277, 8
        %s279 = scalar_lea.vmem %s1, %s278
        %p280 = pneg %p86
        %p281 = pneg %p83
        %p282 = pneg %p107
        %p283 = pneg %p104
        %p284 = pneg %p128
        %p285 = pneg %p125
        %p286 = pneg %p149
        %p287 = pneg %p146
        %p288 = pneg %p177
        %p289 = pneg %p174
        %s290 = sand.u32 %s164, 1
        %s291 = scalar_lea.sflag [#allocation3], %s290
        %s292 = sand.u32 %s164, 1
        %s293 = smul.addr %s292, 272
        %s294 = scalar_lea.vmem [#allocation2], %s293
        %s295 = smul.u32 17, %s24
        %s296 = ssub.s32 18, %s295
        %p297 = scmp.lt.s32.totalorder %s296, 17
        %s298 = scalar_select %p297, %s296, 17
        %s299 = smul.u32 128, %s298
        %s300 = smul.u32 %s299, 2
        %p301 = scmp.lt.s32.totalorder %s23, 1
        %s302 = scalar_select %p301, %s23, 1
        %p303 = scmp.lt.s32.totalorder %s295, 17
        %s304 = scalar_select %p303, %s295, 17
        %s305 = smul.addr %s304, 2
        %s306 = smul.addr %s302, 36
        %s307 = sadd.s32 %s305, %s306
        %s308 = smul.addr %s307, 8
        %s309 = scalar_lea.vmem %s0, %s308
        %s310 = smul.u32 17, %s24
        %s311 = ssub.s32 18, %s310
        %p312 = scmp.lt.s32.totalorder %s311, 17
        %s313 = scalar_select %p312, %s311, 17
        %s314 = smul.u32 128, %s313
        %s315 = smul.u32 %s314, 2
        %s316 = sadd.s32 %s24, 1
        %s317 = smul.u32 %s316, 17
        %p318 = scmp.lt.s32.totalorder %s23, 1
        %s319 = scalar_select %p318, %s23, 1
        %p320 = scmp.lt.s32.totalorder %s317, 17
        %s321 = scalar_select %p320, %s317, 17
        %s322 = smul.addr %s321, 2
        %s323 = smul.addr %s319, 36
        %s324 = sadd.s32 %s322, %s323
        %s325 = smul.addr %s324, 8
        %s326 = scalar_lea.vmem %s1, %s325
        %s327 = sadd.s32 %s24, 1
        %s328 = smul.u32 %s327, 17
        %s329 = smul.u32 34, %s24
        %v330 = vld [vmem:[%s309] sm:$0xff]
        %v331 = vld [vmem:[%s309 + $0x8] sm:$0xff]
        %v332 = vld [vmem:[%s309 + $0x10] sm:$0xff]
        %v333 = vld [vmem:[%s309 + $0x18] sm:$0xff]
        %v334 = vld [vmem:[%s309 + $0x20] sm:$0xff]
        %v335 = vld [vmem:[%s309 + $0x28] sm:$0xff]
        %v336 = vld [vmem:[%s309 + $0x30] sm:$0xff]
        %v337 = vld [vmem:[%s309 + $0x38] sm:$0xff]
        %v338 = vld [vmem:[%s309 + $0x40] sm:$0xff]
        %v339 = vld [vmem:[%s309 + $0x48] sm:$0xff]
        %v340 = vld [vmem:[%s309 + $0x50] sm:$0xff]
        %v341 = vld [vmem:[%s309 + $0x58] sm:$0xff]
        %v342 = vld [vmem:[%s309 + $0x60] sm:$0xff]
        %v343 = vld [vmem:[%s309 + $0x68] sm:$0xff]
        %v344 = vld [vmem:[%s309 + $0x70] sm:$0xff]
        %v345 = vld [vmem:[%s309 + $0x78] sm:$0xff]
        %v346 = vld [vmem:[%s309 + $0x80] sm:$0xff]
        %v347 = vld [vmem:[%s309 + $0x88] sm:$0xff]
        %v348 = vld [vmem:[%s309 + $0x90] sm:$0xff]
        %v349 = vld [vmem:[%s309 + $0x98] sm:$0xff]
        %v350 = vld [vmem:[%s309 + $0xa0] sm:$0xff]
        %v351 = vld [vmem:[%s309 + $0xa8] sm:$0xff]
        %v352 = vld [vmem:[%s309 + $0xb0] sm:$0xff]
        %v353 = vld [vmem:[%s309 + $0xb8] sm:$0xff]
        %v354 = vld [vmem:[%s309 + $0xc0] sm:$0xff]
        %v355 = vld [vmem:[%s309 + $0xc8] sm:$0xff]
        %v356 = vld [vmem:[%s309 + $0xd0] sm:$0xff]
        %v357 = vld [vmem:[%s309 + $0xd8] sm:$0xff]
        %v358 = vld [vmem:[%s309 + $0xe0] sm:$0xff]
        %v359 = vld [vmem:[%s309 + $0xe8] sm:$0xff]
        %v360 = vld [vmem:[%s309 + $0xf0] sm:$0xff]
        %v361 = vld [vmem:[%s309 + $0xf8] sm:$0xff]
        %v362 = vld [vmem:[%s309 + $0x100] sm:$0xff]
        %v363 = vld [vmem:[%s309 + $0x108] sm:$0xff]
        %v364 = vld [vmem:[%s326] sm:$0xff]
        %v365 = vld [vmem:[%s326 + $0x8] sm:$0xff]
        %v366 = vld [vmem:[%s2] sm:$0xf]
        %v367 = vld [vmem:[%s3] sm:$0xf]
        %v368 = vld [vmem:[%s4] sm:$0x1]
        %vm369 = vcmask 31744
        %v371 = vsel %vm369, %v330, 0
        %v374 = vsel %vm369, %v331, 0
        %v377 = vsel %vm369, %v332, 0
        %v380 = vsel %vm369, %v333, 0
        %v383 = vsel %vm369, %v334, 0
        %v386 = vsel %vm369, %v335, 0
        %v389 = vsel %vm369, %v336, 0
        %v392 = vsel %vm369, %v337, 0
        %v395 = vsel %vm369, %v338, 0
        %v398 = vsel %vm369, %v339, 0
        %v401 = vsel %vm369, %v340, 0
        %v404 = vsel %vm369, %v341, 0
        %v407 = vsel %vm369, %v342, 0
        %v410 = vsel %vm369, %v343, 0
        %v413 = vsel %vm369, %v344, 0
        %v416 = vsel %vm369, %v345, 0
        %v419 = vsel %vm369, %v346, 0
        %v422 = vsel %vm369, %v347, 0
        %v425 = vsel %vm369, %v348, 0
        %v428 = vsel %vm369, %v349, 0
        %v431 = vsel %vm369, %v350, 0
        %v434 = vsel %vm369, %v351, 0
        %v437 = vsel %vm369, %v352, 0
        %v440 = vsel %vm369, %v353, 0
        %v443 = vsel %vm369, %v354, 0
        %v446 = vsel %vm369, %v355, 0
        %v449 = vsel %vm369, %v356, 0
        %v452 = vsel %vm369, %v357, 0
        %v455 = vsel %vm369, %v358, 0
        %v458 = vsel %vm369, %v359, 0
        %v461 = vsel %vm369, %v360, 0
        %v464 = vsel %vm369, %v361, 0
        %v467 = vsel %vm369, %v362, 0
        %v470 = vsel %vm369, %v363, 0
        %vm472 = vcmask 1043456
        %v474 = vsel %vm472, %v367, 0
        %476 = vmatprep.subr.mxu0 0.0
        %477 = vmatpush1.msra.mxu0 0.0
        %478 = vmatprep.subr.mxu0 0.0
        %479 = vmatpush1.msra.mxu0 0.0
        %480 = vmatprep.subr.mxu0 0.0
        %481 = vmatpush1.msra.mxu0 0.0
        %482 = vmatprep.subr.mxu0 0.0
        %483 = vmatpush1.msra.mxu0 0.0
        %484 = vmatprep.subr.mxu0 0.0
        %485 = vmatpush1.msra.mxu0 0.0
        %486 = vmatprep.subr.mxu0 0.0
        %487 = vmatpush1.msra.mxu0 0.0
        %488 = vmatprep.subr.mxu0 0.0
        %489 = vmatpush1.msra.mxu0 0.0
        %490 = vmatprep.subr.mxu0 0.0
        %491 = vmatpush1.msra.mxu0 0.0
        %492 = vmatprep.subr.mxu0 0.0
        %493 = vmatpush1.msra.mxu0 0.0
        %494 = vmatprep.subr.mxu0 0.0
        %495 = vmatpush1.msra.mxu0 0.0
        %496 = vmatprep.subr.mxu0 0.0
        %497 = vmatpush1.msra.mxu0 0.0
        %498 = vmatprep.subr.mxu0 0.0
        %499 = vmatpush1.msra.mxu0 0.0
        %500 = vmatprep.subr.mxu0 0.0
        %501 = vmatpush1.msra.mxu0 0.0
        %502 = vmatprep.subr.mxu0 0.0
        %503 = vmatpush1.msra.mxu0 0.0
        %504 = vmatprep.subr.mxu0 0.0
        %505 = vmatpush1.msra.mxu0 0.0
        %506 = vmatprep.subr.mxu0 0.0
        %507 = vmatpush1.msra.mxu0 %v474
        %508 = vmatprep.subr.mxu0 0.0
        %509 = vmatpush2.msra.mxu0 0.0
        %510 = vmatprep.subr.mxu0 0.0
        %511 = vmatpush2.msra.mxu0 0.0
        %512 = vmatprep.subr.mxu0 0.0
        %513 = vmatpush2.msra.mxu0 0.0
        %514 = vmatprep.subr.mxu0 0.0
        %515 = vmatpush2.msra.mxu0 0.0
        %516 = vmatprep.subr.mxu0 0.0
        %517 = vmatpush2.msra.mxu0 0.0
        %518 = vmatprep.subr.mxu0 0.0
        %519 = vmatpush2.msra.mxu0 0.0
        %520 = vmatprep.subr.mxu0 0.0
        %521 = vmatpush2.msra.mxu0 0.0
        %522 = vmatprep.subr.mxu0 0.0
        %523 = vmatpush2.msra.mxu0 0.0
        %524 = vmatprep.subr.mxu0 0.0
        %525 = vmatpush2.msra.mxu0 0.0
        %526 = vmatprep.subr.mxu0 0.0
        %527 = vmatpush2.msra.mxu0 0.0
        %528 = vmatprep.subr.mxu0 0.0
        %529 = vmatpush2.msra.mxu0 0.0
        %530 = vmatprep.subr.mxu0 0.0
        %531 = vmatpush2.msra.mxu0 0.0
        %532 = vmatprep.subr.mxu0 0.0
        %533 = vmatpush2.msra.mxu0 0.0
        %534 = vmatprep.subr.mxu0 0.0
        %535 = vmatpush2.msra.mxu0 0.0
        %536 = vmatprep.subr.mxu0 0.0
        %537 = vmatpush2.msra.mxu0 0.0
        %538 = vmatprep.subr.mxu0 0.0
        %539 = vmatpush2.msra.mxu0 0.0
        %540 = vmatprep.mubr.f32.mxu0 0.0
        %541 = vmatmul.mubr.f32.gmra.mxu0 %v371
        %v542 = vpop.f32.mrf.mxu0
        %v543 = vadd.f32 0.0, %v542
        %v544 = vpop.f32.mrf.mxu0
        %545 = vmatprep.mubr.f32.mxu0 0.0
        %546 = vmatmul.mubr.f32.gmra.mxu0 %v374
        %v547 = vpop.f32.mrf.mxu0
        %v548 = vadd.f32 0.0, %v547
        %v549 = vpop.f32.mrf.mxu0
        %550 = vmatprep.mubr.f32.mxu0 0.0
        %551 = vmatmul.mubr.f32.gmra.mxu0 %v377
        %v552 = vpop.f32.mrf.mxu0
        %v553 = vadd.f32 0.0, %v552
        %v554 = vpop.f32.mrf.mxu0
        %555 = vmatprep.mubr.f32.mxu0 0.0
        %556 = vmatmul.mubr.f32.gmra.mxu0 %v380
        %v557 = vpop.f32.mrf.mxu0
        %v558 = vadd.f32 0.0, %v557
        %v559 = vpop.f32.mrf.mxu0
        %560 = vmatprep.mubr.f32.mxu0 0.0
        %561 = vmatmul.mubr.f32.gmra.mxu0 %v383
        %v562 = vpop.f32.mrf.mxu0
        %v563 = vadd.f32 0.0, %v562
        %v564 = vpop.f32.mrf.mxu0
        %565 = vmatprep.mubr.f32.mxu0 0.0
        %566 = vmatmul.mubr.f32.gmra.mxu0 %v386
        %v567 = vpop.f32.mrf.mxu0
        %v568 = vadd.f32 0.0, %v567
        %v569 = vpop.f32.mrf.mxu0
        %570 = vmatprep.mubr.f32.mxu0 0.0
        %571 = vmatmul.mubr.f32.gmra.mxu0 %v389
        %v572 = vpop.f32.mrf.mxu0
        %v573 = vadd.f32 0.0, %v572
        %v574 = vpop.f32.mrf.mxu0
        %575 = vmatprep.mubr.f32.mxu0 0.0
        %576 = vmatmul.mubr.f32.gmra.mxu0 %v392
        %v577 = vpop.f32.mrf.mxu0
        %v578 = vadd.f32 0.0, %v577
        %v579 = vpop.f32.mrf.mxu0
        %580 = vmatprep.mubr.f32.mxu0 0.0
        %581 = vmatmul.mubr.f32.gmra.mxu0 %v395
        %v582 = vpop.f32.mrf.mxu0
        %v583 = vadd.f32 0.0, %v582
        %v584 = vpop.f32.mrf.mxu0
        %585 = vmatprep.mubr.f32.mxu0 0.0
        %586 = vmatmul.mubr.f32.gmra.mxu0 %v398
        %v587 = vpop.f32.mrf.mxu0
        %v588 = vadd.f32 0.0, %v587
        %v589 = vpop.f32.mrf.mxu0
        %590 = vmatprep.mubr.f32.mxu0 0.0
        %591 = vmatmul.mubr.f32.gmra.mxu0 %v401
        %v592 = vpop.f32.mrf.mxu0
        %v593 = vadd.f32 0.0, %v592
        %v594 = vpop.f32.mrf.mxu0
        %595 = vmatprep.mubr.f32.mxu0 0.0
        %596 = vmatmul.mubr.f32.gmra.mxu0 %v404
        %v597 = vpop.f32.mrf.mxu0
        %v598 = vadd.f32 0.0, %v597
        %v599 = vpop.f32.mrf.mxu0
        %600 = vmatprep.mubr.f32.mxu0 0.0
        %601 = vmatmul.mubr.f32.gmra.mxu0 %v407
        %v602 = vpop.f32.mrf.mxu0
        %v603 = vadd.f32 0.0, %v602
        %v604 = vpop.f32.mrf.mxu0
        %605 = vmatprep.mubr.f32.mxu0 0.0
        %606 = vmatmul.mubr.f32.gmra.mxu0 %v410
        %v607 = vpop.f32.mrf.mxu0
        %v608 = vadd.f32 0.0, %v607
        %v609 = vpop.f32.mrf.mxu0
        %610 = vmatprep.mubr.f32.mxu0 0.0
        %611 = vmatmul.mubr.f32.gmra.mxu0 %v413
        %v612 = vpop.f32.mrf.mxu0
        %v613 = vadd.f32 0.0, %v612
        %v614 = vpop.f32.mrf.mxu0
        %615 = vmatprep.mubr.f32.mxu0 0.0
        %616 = vmatmul.mubr.f32.gmra.mxu0 %v416
        %v617 = vpop.f32.mrf.mxu0
        %v618 = vadd.f32 0.0, %v617
        %v619 = vpop.f32.mrf.mxu0
        %620 = vmatprep.mubr.f32.mxu0 0.0
        %621 = vmatmul.mubr.f32.gmra.mxu0 %v419
        %v622 = vpop.f32.mrf.mxu0
        %v623 = vadd.f32 0.0, %v622
        %v624 = vpop.f32.mrf.mxu0
        %625 = vmatprep.mubr.f32.mxu0 0.0
        %626 = vmatmul.mubr.f32.gmra.mxu0 %v422
        %v627 = vpop.f32.mrf.mxu0
        %v628 = vadd.f32 0.0, %v627
        %v629 = vpop.f32.mrf.mxu0
        %630 = vmatprep.mubr.f32.mxu0 0.0
        %631 = vmatmul.mubr.f32.gmra.mxu0 %v425
        %v632 = vpop.f32.mrf.mxu0
        %v633 = vadd.f32 0.0, %v632
        %v634 = vpop.f32.mrf.mxu0
        %635 = vmatprep.mubr.f32.mxu0 0.0
        %636 = vmatmul.mubr.f32.gmra.mxu0 %v428
        %v637 = vpop.f32.mrf.mxu0
        %v638 = vadd.f32 0.0, %v637
        %v639 = vpop.f32.mrf.mxu0
        %640 = vmatprep.mubr.f32.mxu0 0.0
        %641 = vmatmul.mubr.f32.gmra.mxu0 %v431
        %v642 = vpop.f32.mrf.mxu0
        %v643 = vadd.f32 0.0, %v642
        %v644 = vpop.f32.mrf.mxu0
        %645 = vmatprep.mubr.f32.mxu0 0.0
        %646 = vmatmul.mubr.f32.gmra.mxu0 %v434
        %v647 = vpop.f32.mrf.mxu0
        %v648 = vadd.f32 0.0, %v647
        %v649 = vpop.f32.mrf.mxu0
        %650 = vmatprep.mubr.f32.mxu0 0.0
        %651 = vmatmul.mubr.f32.gmra.mxu0 %v437
        %v652 = vpop.f32.mrf.mxu0
        %v653 = vadd.f32 0.0, %v652
        %v654 = vpop.f32.mrf.mxu0
        %655 = vmatprep.mubr.f32.mxu0 0.0
        %656 = vmatmul.mubr.f32.gmra.mxu0 %v440
        %v657 = vpop.f32.mrf.mxu0
        %v658 = vadd.f32 0.0, %v657
        %v659 = vpop.f32.mrf.mxu0
        %660 = vmatprep.mubr.f32.mxu0 0.0
        %661 = vmatmul.mubr.f32.gmra.mxu0 %v443
        %v662 = vpop.f32.mrf.mxu0
        %v663 = vadd.f32 0.0, %v662
        %v664 = vpop.f32.mrf.mxu0
        %665 = vmatprep.mubr.f32.mxu0 0.0
        %666 = vmatmul.mubr.f32.gmra.mxu0 %v446
        %v667 = vpop.f32.mrf.mxu0
        %v668 = vadd.f32 0.0, %v667
        %v669 = vpop.f32.mrf.mxu0
        %670 = vmatprep.mubr.f32.mxu0 0.0
        %671 = vmatmul.mubr.f32.gmra.mxu0 %v449
        %v672 = vpop.f32.mrf.mxu0
        %v673 = vadd.f32 0.0, %v672
        %v674 = vpop.f32.mrf.mxu0
        %675 = vmatprep.mubr.f32.mxu0 0.0
        %676 = vmatmul.mubr.f32.gmra.mxu0 %v452
        %v677 = vpop.f32.mrf.mxu0
        %v678 = vadd.f32 0.0, %v677
        %v679 = vpop.f32.mrf.mxu0
        %680 = vmatprep.mubr.f32.mxu0 0.0
        %681 = vmatmul.mubr.f32.gmra.mxu0 %v455
        %v682 = vpop.f32.mrf.mxu0
        %v683 = vadd.f32 0.0, %v682
        %v684 = vpop.f32.mrf.mxu0
        %685 = vmatprep.mubr.f32.mxu0 0.0
        %686 = vmatmul.mubr.f32.gmra.mxu0 %v458
        %v687 = vpop.f32.mrf.mxu0
        %v688 = vadd.f32 0.0, %v687
        %v689 = vpop.f32.mrf.mxu0
        %690 = vmatprep.mubr.f32.mxu0 0.0
        %691 = vmatmul.mubr.f32.gmra.mxu0 %v461
        %v692 = vpop.f32.mrf.mxu0
        %v693 = vadd.f32 0.0, %v692
        %v694 = vpop.f32.mrf.mxu0
        %695 = vmatprep.mubr.f32.mxu0 0.0
        %696 = vmatmul.mubr.f32.gmra.mxu0 %v464
        %v697 = vpop.f32.mrf.mxu0
        %v698 = vadd.f32 0.0, %v697
        %v699 = vpop.f32.mrf.mxu0
        %700 = vmatprep.mubr.f32.mxu0 0.0
        %701 = vmatmul.mubr.f32.gmra.mxu0 %v467
        %v702 = vpop.f32.mrf.mxu0
        %v703 = vadd.f32 0.0, %v702
        %v704 = vpop.f32.mrf.mxu0
        %705 = vmatprep.mubr.f32.mxu0 0.0
        %706 = vmatmul.mubr.f32.gmra.mxu0 %v470
        %v707 = vpop.f32.mrf.mxu0
        %v708 = vadd.f32 0.0, %v707
        %v709 = vpop.f32.mrf.mxu0
        %710 = vdwg.mxu0
        %v712 = vsel %vm472, %v366, 0
        %714 = vmatprep.subr.mxu0 0.0
        %715 = vmatpush1.msra.mxu0 0.0
        %716 = vmatprep.subr.mxu0 0.0
        %717 = vmatpush1.msra.mxu0 0.0
        %718 = vmatprep.subr.mxu0 0.0
        %719 = vmatpush1.msra.mxu0 0.0
        %720 = vmatprep.subr.mxu0 0.0
        %721 = vmatpush1.msra.mxu0 0.0
        %722 = vmatprep.subr.mxu0 0.0
        %723 = vmatpush1.msra.mxu0 0.0
        %724 = vmatprep.subr.mxu0 0.0
        %725 = vmatpush1.msra.mxu0 0.0
        %726 = vmatprep.subr.mxu0 0.0
        %727 = vmatpush1.msra.mxu0 0.0
        %728 = vmatprep.subr.mxu0 0.0
        %729 = vmatpush1.msra.mxu0 0.0
        %730 = vmatprep.subr.mxu0 0.0
        %731 = vmatpush1.msra.mxu0 0.0
        %732 = vmatprep.subr.mxu0 0.0
        %733 = vmatpush1.msra.mxu0 0.0
        %734 = vmatprep.subr.mxu0 0.0
        %735 = vmatpush1.msra.mxu0 0.0
        %736 = vmatprep.subr.mxu0 0.0
        %737 = vmatpush1.msra.mxu0 0.0
        %738 = vmatprep.subr.mxu0 0.0
        %739 = vmatpush1.msra.mxu0 0.0
        %740 = vmatprep.subr.mxu0 0.0
        %741 = vmatpush1.msra.mxu0 0.0
        %742 = vmatprep.subr.mxu0 0.0
        %743 = vmatpush1.msra.mxu0 0.0
        %744 = vmatprep.subr.mxu0 0.0
        %745 = vmatpush1.msra.mxu0 %v712
        %746 = vmatprep.subr.mxu0 0.0
        %747 = vmatpush2.msra.mxu0 0.0
        %748 = vmatprep.subr.mxu0 0.0
        %749 = vmatpush2.msra.mxu0 0.0
        %750 = vmatprep.subr.mxu0 0.0
        %751 = vmatpush2.msra.mxu0 0.0
        %752 = vmatprep.subr.mxu0 0.0
        %753 = vmatpush2.msra.mxu0 0.0
        %754 = vmatprep.subr.mxu0 0.0
        %755 = vmatpush2.msra.mxu0 0.0
        %756 = vmatprep.subr.mxu0 0.0
        %757 = vmatpush2.msra.mxu0 0.0
        %758 = vmatprep.subr.mxu0 0.0
        %759 = vmatpush2.msra.mxu0 0.0
        %760 = vmatprep.subr.mxu0 0.0
        %761 = vmatpush2.msra.mxu0 0.0
        %762 = vmatprep.subr.mxu0 0.0
        %763 = vmatpush2.msra.mxu0 0.0
        %764 = vmatprep.subr.mxu0 0.0
        %765 = vmatpush2.msra.mxu0 0.0
        %766 = vmatprep.subr.mxu0 0.0
        %767 = vmatpush2.msra.mxu0 0.0
        %768 = vmatprep.subr.mxu0 0.0
        %769 = vmatpush2.msra.mxu0 0.0
        %770 = vmatprep.subr.mxu0 0.0
        %771 = vmatpush2.msra.mxu0 0.0
        %772 = vmatprep.subr.mxu0 0.0
        %773 = vmatpush2.msra.mxu0 0.0
        %774 = vmatprep.subr.mxu0 0.0
        %775 = vmatpush2.msra.mxu0 0.0
        %776 = vmatprep.subr.mxu0 0.0
        %777 = vmatpush2.msra.mxu0 0.0
        %778 = vmatprep.mubr.f32.mxu0 0.0
        %779 = vmatmul.mubr.f32.gmra.mxu0 %v377
        %v780 = vpop.f32.mrf.mxu0
        %v781 = vadd.f32 0.0, %v780
        %v782 = vpop.f32.mrf.mxu0
        %783 = vmatprep.mubr.f32.mxu0 0.0
        %784 = vmatmul.mubr.f32.gmra.mxu0 %v380
        %v785 = vpop.f32.mrf.mxu0
        %v786 = vadd.f32 0.0, %v785
        %v787 = vpop.f32.mrf.mxu0
        %788 = vmatprep.mubr.f32.mxu0 0.0
        %789 = vmatmul.mubr.f32.gmra.mxu0 %v383
        %v790 = vpop.f32.mrf.mxu0
        %v791 = vadd.f32 0.0, %v790
        %v792 = vpop.f32.mrf.mxu0
        %793 = vmatprep.mubr.f32.mxu0 0.0
        %794 = vmatmul.mubr.f32.gmra.mxu0 %v386
        %v795 = vpop.f32.mrf.mxu0
        %v796 = vadd.f32 0.0, %v795
        %v797 = vpop.f32.mrf.mxu0
        %798 = vmatprep.mubr.f32.mxu0 0.0
        %799 = vmatmul.mubr.f32.gmra.mxu0 %v389
        %v800 = vpop.f32.mrf.mxu0
        %v801 = vadd.f32 0.0, %v800
        %v802 = vpop.f32.mrf.mxu0
        %803 = vmatprep.mubr.f32.mxu0 0.0
        %804 = vmatmul.mubr.f32.gmra.mxu0 %v392
        %v805 = vpop.f32.mrf.mxu0
        %v806 = vadd.f32 0.0, %v805
        %v807 = vpop.f32.mrf.mxu0
        %808 = vmatprep.mubr.f32.mxu0 0.0
        %809 = vmatmul.mubr.f32.gmra.mxu0 %v395
        %v810 = vpop.f32.mrf.mxu0
        %v811 = vadd.f32 0.0, %v810
        %v812 = vpop.f32.mrf.mxu0
        %813 = vmatprep.mubr.f32.mxu0 0.0
        %814 = vmatmul.mubr.f32.gmra.mxu0 %v398
        %v815 = vpop.f32.mrf.mxu0
        %v816 = vadd.f32 0.0, %v815
        %v817 = vpop.f32.mrf.mxu0
        %818 = vmatprep.mubr.f32.mxu0 0.0
        %819 = vmatmul.mubr.f32.gmra.mxu0 %v401
        %v820 = vpop.f32.mrf.mxu0
        %v821 = vadd.f32 0.0, %v820
        %v822 = vpop.f32.mrf.mxu0
        %823 = vmatprep.mubr.f32.mxu0 0.0
        %824 = vmatmul.mubr.f32.gmra.mxu0 %v404
        %v825 = vpop.f32.mrf.mxu0
        %v826 = vadd.f32 0.0, %v825
        %v827 = vpop.f32.mrf.mxu0
        %828 = vmatprep.mubr.f32.mxu0 0.0
        %829 = vmatmul.mubr.f32.gmra.mxu0 %v407
        %v830 = vpop.f32.mrf.mxu0
        %v831 = vadd.f32 0.0, %v830
        %v832 = vpop.f32.mrf.mxu0
        %833 = vmatprep.mubr.f32.mxu0 0.0
        %834 = vmatmul.mubr.f32.gmra.mxu0 %v410
        %v835 = vpop.f32.mrf.mxu0
        %v836 = vadd.f32 0.0, %v835
        %v837 = vpop.f32.mrf.mxu0
        %838 = vmatprep.mubr.f32.mxu0 0.0
        %839 = vmatmul.mubr.f32.gmra.mxu0 %v413
        %v840 = vpop.f32.mrf.mxu0
        %v841 = vadd.f32 0.0, %v840
        %v842 = vpop.f32.mrf.mxu0
        %843 = vmatprep.mubr.f32.mxu0 0.0
        %844 = vmatmul.mubr.f32.gmra.mxu0 %v416
        %v845 = vpop.f32.mrf.mxu0
        %v846 = vadd.f32 0.0, %v845
        %v847 = vpop.f32.mrf.mxu0
        %848 = vmatprep.mubr.f32.mxu0 0.0
        %849 = vmatmul.mubr.f32.gmra.mxu0 %v419
        %v850 = vpop.f32.mrf.mxu0
        %v851 = vadd.f32 0.0, %v850
        %v852 = vpop.f32.mrf.mxu0
        %853 = vmatprep.mubr.f32.mxu0 0.0
        %854 = vmatmul.mubr.f32.gmra.mxu0 %v422
        %v855 = vpop.f32.mrf.mxu0
        %v856 = vadd.f32 0.0, %v855
        %v857 = vpop.f32.mrf.mxu0
        %858 = vmatprep.mubr.f32.mxu0 0.0
        %859 = vmatmul.mubr.f32.gmra.mxu0 %v425
        %v860 = vpop.f32.mrf.mxu0
        %v861 = vadd.f32 0.0, %v860
        %v862 = vpop.f32.mrf.mxu0
        %863 = vmatprep.mubr.f32.mxu0 0.0
        %864 = vmatmul.mubr.f32.gmra.mxu0 %v428
        %v865 = vpop.f32.mrf.mxu0
        %v866 = vadd.f32 0.0, %v865
        %v867 = vpop.f32.mrf.mxu0
        %868 = vmatprep.mubr.f32.mxu0 0.0
        %869 = vmatmul.mubr.f32.gmra.mxu0 %v431
        %v870 = vpop.f32.mrf.mxu0
        %v871 = vadd.f32 0.0, %v870
        %v872 = vpop.f32.mrf.mxu0
        %873 = vmatprep.mubr.f32.mxu0 0.0
        %874 = vmatmul.mubr.f32.gmra.mxu0 %v434
        %v875 = vpop.f32.mrf.mxu0
        %v876 = vadd.f32 0.0, %v875
        %v877 = vpop.f32.mrf.mxu0
        %878 = vmatprep.mubr.f32.mxu0 0.0
        %879 = vmatmul.mubr.f32.gmra.mxu0 %v437
        %v880 = vpop.f32.mrf.mxu0
        %v881 = vadd.f32 0.0, %v880
        %v882 = vpop.f32.mrf.mxu0
        %883 = vmatprep.mubr.f32.mxu0 0.0
        %884 = vmatmul.mubr.f32.gmra.mxu0 %v440
        %v885 = vpop.f32.mrf.mxu0
        %v886 = vadd.f32 0.0, %v885
        %v887 = vpop.f32.mrf.mxu0
        %888 = vmatprep.mubr.f32.mxu0 0.0
        %889 = vmatmul.mubr.f32.gmra.mxu0 %v443
        %v890 = vpop.f32.mrf.mxu0
        %v891 = vadd.f32 0.0, %v890
        %v892 = vpop.f32.mrf.mxu0
        %893 = vmatprep.mubr.f32.mxu0 0.0
        %894 = vmatmul.mubr.f32.gmra.mxu0 %v446
        %v895 = vpop.f32.mrf.mxu0
        %v896 = vadd.f32 0.0, %v895
        %v897 = vpop.f32.mrf.mxu0
        %898 = vmatprep.mubr.f32.mxu0 0.0
        %899 = vmatmul.mubr.f32.gmra.mxu0 %v449
        %v900 = vpop.f32.mrf.mxu0
        %v901 = vadd.f32 0.0, %v900
        %v902 = vpop.f32.mrf.mxu0
        %903 = vmatprep.mubr.f32.mxu0 0.0
        %904 = vmatmul.mubr.f32.gmra.mxu0 %v452
        %v905 = vpop.f32.mrf.mxu0
        %v906 = vadd.f32 0.0, %v905
        %v907 = vpop.f32.mrf.mxu0
        %908 = vmatprep.mubr.f32.mxu0 0.0
        %909 = vmatmul.mubr.f32.gmra.mxu0 %v455
        %v910 = vpop.f32.mrf.mxu0
        %v911 = vadd.f32 0.0, %v910
        %v912 = vpop.f32.mrf.mxu0
        %913 = vmatprep.mubr.f32.mxu0 0.0
        %914 = vmatmul.mubr.f32.gmra.mxu0 %v458
        %v915 = vpop.f32.mrf.mxu0
        %v916 = vadd.f32 0.0, %v915
        %v917 = vpop.f32.mrf.mxu0
        %918 = vmatprep.mubr.f32.mxu0 0.0
        %919 = vmatmul.mubr.f32.gmra.mxu0 %v461
        %v920 = vpop.f32.mrf.mxu0
        %v921 = vadd.f32 0.0, %v920
        %v922 = vpop.f32.mrf.mxu0
        %923 = vmatprep.mubr.f32.mxu0 0.0
        %924 = vmatmul.mubr.f32.gmra.mxu0 %v464
        %v925 = vpop.f32.mrf.mxu0
        %v926 = vadd.f32 0.0, %v925
        %v927 = vpop.f32.mrf.mxu0
        %928 = vmatprep.mubr.f32.mxu0 0.0
        %929 = vmatmul.mubr.f32.gmra.mxu0 %v467
        %v930 = vpop.f32.mrf.mxu0
        %v931 = vadd.f32 0.0, %v930
        %v932 = vpop.f32.mrf.mxu0
        %933 = vmatprep.mubr.f32.mxu0 0.0
        %934 = vmatmul.mubr.f32.gmra.mxu0 %v470
        %v935 = vpop.f32.mrf.mxu0
        %v936 = vadd.f32 0.0, %v935
        %v937 = vpop.f32.mrf.mxu0
        %938 = vdwg.mxu0
        %v939 = vadd.f32 %v543, %v781
        %v940 = vadd.f32 %v548, %v786
        %v941 = vadd.f32 %v553, %v791
        %v942 = vadd.f32 %v558, %v796
        %v943 = vadd.f32 %v563, %v801
        %v944 = vadd.f32 %v568, %v806
        %v945 = vadd.f32 %v573, %v811
        %v946 = vadd.f32 %v578, %v816
        %v947 = vadd.f32 %v583, %v821
        %v948 = vadd.f32 %v588, %v826
        %v949 = vadd.f32 %v593, %v831
        %v950 = vadd.f32 %v598, %v836
        %v951 = vadd.f32 %v603, %v841
        %v952 = vadd.f32 %v608, %v846
        %v953 = vadd.f32 %v613, %v851
        %v954 = vadd.f32 %v618, %v856
        %v955 = vadd.f32 %v623, %v861
        %v956 = vadd.f32 %v628, %v866
        %v957 = vadd.f32 %v633, %v871
        %v958 = vadd.f32 %v638, %v876
        %v959 = vadd.f32 %v643, %v881
        %v960 = vadd.f32 %v648, %v886
        %v961 = vadd.f32 %v653, %v891
        %v962 = vadd.f32 %v658, %v896
        %v963 = vadd.f32 %v663, %v901
        %v964 = vadd.f32 %v668, %v906
        %v965 = vadd.f32 %v673, %v911
        %v966 = vadd.f32 %v678, %v916
        %v967 = vadd.f32 %v683, %v921
        %v968 = vadd.f32 %v688, %v926
        %v969 = vadd.f32 %v693, %v931
        %v970 = vadd.f32 %v698, %v936
        %v972 = vlaneseq
        %v973 = vshrl.u32 %v972, 7
        %v974 = vsub.s32 0, %v973
        %v975 = vrot.slane %v368, %v974
        %v977 = vadd.f32 %v939, %v975
        %v978 = vadd.f32 %v940, %v975
        %v979 = vadd.f32 %v941, %v975
        %v980 = vadd.f32 %v942, %v975
        %v981 = vadd.f32 %v943, %v975
        %v982 = vadd.f32 %v944, %v975
        %v983 = vadd.f32 %v945, %v975
        %v984 = vadd.f32 %v946, %v975
        %v985 = vadd.f32 %v947, %v975
        %v986 = vadd.f32 %v948, %v975
        %v987 = vadd.f32 %v949, %v975
        %v988 = vadd.f32 %v950, %v975
        %v989 = vadd.f32 %v951, %v975
        %v990 = vadd.f32 %v952, %v975
        %v991 = vadd.f32 %v953, %v975
        %v992 = vadd.f32 %v954, %v975
        %v993 = vadd.f32 %v955, %v975
        %v994 = vadd.f32 %v956, %v975
        %v995 = vadd.f32 %v957, %v975
        %v996 = vadd.f32 %v958, %v975
        %v997 = vadd.f32 %v959, %v975
        %v998 = vadd.f32 %v960, %v975
        %v999 = vadd.f32 %v961, %v975
        %v1000 = vadd.f32 %v962, %v975
        %v1001 = vadd.f32 %v963, %v975
        %v1002 = vadd.f32 %v964, %v975
        %v1003 = vadd.f32 %v965, %v975
        %v1004 = vadd.f32 %v966, %v975
        %v1005 = vadd.f32 %v967, %v975
        %v1006 = vadd.f32 %v968, %v975
        %v1007 = vadd.f32 %v969, %v975
        %v1008 = vadd.f32 %v970, %v975
        %vm1009 = vcmp.ge.f32.partialorder %v977, 0.0
        %vm1010 = vcmp.ge.f32.partialorder %v978, 0.0
        %vm1011 = vcmp.ge.f32.partialorder %v979, 0.0
        %vm1012 = vcmp.ge.f32.partialorder %v980, 0.0
        %vm1013 = vcmp.ge.f32.partialorder %v981, 0.0
        %vm1014 = vcmp.ge.f32.partialorder %v982, 0.0
        %vm1015 = vcmp.ge.f32.partialorder %v983, 0.0
        %vm1016 = vcmp.ge.f32.partialorder %v984, 0.0
        %vm1017 = vcmp.ge.f32.partialorder %v985, 0.0
        %vm1018 = vcmp.ge.f32.partialorder %v986, 0.0
        %vm1019 = vcmp.ge.f32.partialorder %v987, 0.0
        %vm1020 = vcmp.ge.f32.partialorder %v988, 0.0
        %vm1021 = vcmp.ge.f32.partialorder %v989, 0.0
        %vm1022 = vcmp.ge.f32.partialorder %v990, 0.0
        %vm1023 = vcmp.ge.f32.partialorder %v991, 0.0
        %vm1024 = vcmp.ge.f32.partialorder %v992, 0.0
        %vm1025 = vcmp.ge.f32.partialorder %v993, 0.0
        %vm1026 = vcmp.ge.f32.partialorder %v994, 0.0
        %vm1027 = vcmp.ge.f32.partialorder %v995, 0.0
        %vm1028 = vcmp.ge.f32.partialorder %v996, 0.0
        %vm1029 = vcmp.ge.f32.partialorder %v997, 0.0
        %vm1030 = vcmp.ge.f32.partialorder %v998, 0.0
        %vm1031 = vcmp.ge.f32.partialorder %v999, 0.0
        %vm1032 = vcmp.ge.f32.partialorder %v1000, 0.0
        %vm1033 = vcmp.ge.f32.partialorder %v1001, 0.0
        %vm1034 = vcmp.ge.f32.partialorder %v1002, 0.0
        %vm1035 = vcmp.ge.f32.partialorder %v1003, 0.0
        %vm1036 = vcmp.ge.f32.partialorder %v1004, 0.0
        %vm1037 = vcmp.ge.f32.partialorder %v1005, 0.0
        %vm1038 = vcmp.ge.f32.partialorder %v1006, 0.0
        %vm1039 = vcmp.ge.f32.partialorder %v1007, 0.0
        %vm1040 = vcmp.ge.f32.partialorder %v1008, 0.0
        %v1041 = vmul.f32 %v977, 0.2
        %v1042 = vmul.f32 %v978, 0.2
        %v1043 = vmul.f32 %v979, 0.2
        %v1044 = vmul.f32 %v980, 0.2
        %v1045 = vmul.f32 %v981, 0.2
        %v1046 = vmul.f32 %v982, 0.2
        %v1047 = vmul.f32 %v983, 0.2
        %v1048 = vmul.f32 %v984, 0.2
        %v1049 = vmul.f32 %v985, 0.2
        %v1050 = vmul.f32 %v986, 0.2
        %v1051 = vmul.f32 %v987, 0.2
        %v1052 = vmul.f32 %v988, 0.2
        %v1053 = vmul.f32 %v989, 0.2
        %v1054 = vmul.f32 %v990, 0.2
        %v1055 = vmul.f32 %v991, 0.2
        %v1056 = vmul.f32 %v992, 0.2
        %v1057 = vmul.f32 %v993, 0.2
        %v1058 = vmul.f32 %v994, 0.2
        %v1059 = vmul.f32 %v995, 0.2
        %v1060 = vmul.f32 %v996, 0.2
        %v1061 = vmul.f32 %v997, 0.2
        %v1062 = vmul.f32 %v998, 0.2
        %v1063 = vmul.f32 %v999, 0.2
        %v1064 = vmul.f32 %v1000, 0.2
        %v1065 = vmul.f32 %v1001, 0.2
        %v1066 = vmul.f32 %v1002, 0.2
        %v1067 = vmul.f32 %v1003, 0.2
        %v1068 = vmul.f32 %v1004, 0.2
        %v1069 = vmul.f32 %v1005, 0.2
        %v1070 = vmul.f32 %v1006, 0.2
        %v1071 = vmul.f32 %v1007, 0.2
        %v1072 = vmul.f32 %v1008, 0.2
        %v1073 = vsel %vm1009, %v977, %v1041
        %v1074 = vsel %vm1010, %v978, %v1042
        %v1075 = vsel %vm1011, %v979, %v1043
        %v1076 = vsel %vm1012, %v980, %v1044
        %v1077 = vsel %vm1013, %v981, %v1045
        %v1078 = vsel %vm1014, %v982, %v1046
        %v1079 = vsel %vm1015, %v983, %v1047
        %v1080 = vsel %vm1016, %v984, %v1048
        %v1081 = vsel %vm1017, %v985, %v1049
        %v1082 = vsel %vm1018, %v986, %v1050
        %v1083 = vsel %vm1019, %v987, %v1051
        %v1084 = vsel %vm1020, %v988, %v1052
        %v1085 = vsel %vm1021, %v989, %v1053
        %v1086 = vsel %vm1022, %v990, %v1054
        %v1087 = vsel %vm1023, %v991, %v1055
        %v1088 = vsel %vm1024, %v992, %v1056
        %v1089 = vsel %vm1025, %v993, %v1057
        %v1090 = vsel %vm1026, %v994, %v1058
        %v1091 = vsel %vm1027, %v995, %v1059
        %v1092 = vsel %vm1028, %v996, %v1060
        %v1093 = vsel %vm1029, %v997, %v1061
        %v1094 = vsel %vm1030, %v998, %v1062
        %v1095 = vsel %vm1031, %v999, %v1063
        %v1096 = vsel %vm1032, %v1000, %v1064
        %v1097 = vsel %vm1033, %v1001, %v1065
        %v1098 = vsel %vm1034, %v1002, %v1066
        %v1099 = vsel %vm1035, %v1003, %v1067
        %v1100 = vsel %vm1036, %v1004, %v1068
        %v1101 = vsel %vm1037, %v1005, %v1069
        %v1102 = vsel %vm1038, %v1006, %v1070
        %v1103 = vsel %vm1039, %v1007, %v1071
        %v1104 = vsel %vm1040, %v1008, %v1072
        %1105 = vst [vmem:[%s294] sm:$0xff] %v1073
        %1106 = vst [vmem:[%s294 + $0x8] sm:$0xff] %v1074
        %1107 = vst [vmem:[%s294 + $0x10] sm:$0xff] %v1075
        %1108 = vst [vmem:[%s294 + $0x18] sm:$0xff] %v1076
        %1109 = vst [vmem:[%s294 + $0x20] sm:$0xff] %v1077
        %1110 = vst [vmem:[%s294 + $0x28] sm:$0xff] %v1078
        %1111 = vst [vmem:[%s294 + $0x30] sm:$0xff] %v1079
        %1112 = vst [vmem:[%s294 + $0x38] sm:$0xff] %v1080
        %1113 = vst [vmem:[%s294 + $0x40] sm:$0xff] %v1081
        %1114 = vst [vmem:[%s294 + $0x48] sm:$0xff] %v1082
        %1115 = vst [vmem:[%s294 + $0x50] sm:$0xff] %v1083
        %1116 = vst [vmem:[%s294 + $0x58] sm:$0xff] %v1084
        %1117 = vst [vmem:[%s294 + $0x60] sm:$0xff] %v1085
        %1118 = vst [vmem:[%s294 + $0x68] sm:$0xff] %v1086
        %1119 = vst [vmem:[%s294 + $0x70] sm:$0xff] %v1087
        %1120 = vst [vmem:[%s294 + $0x78] sm:$0xff] %v1088
        %1121 = vst [vmem:[%s294 + $0x80] sm:$0xff] %v1089
        %1122 = vst [vmem:[%s294 + $0x88] sm:$0xff] %v1090
        %1123 = vst [vmem:[%s294 + $0x90] sm:$0xff] %v1091
        %1124 = vst [vmem:[%s294 + $0x98] sm:$0xff] %v1092
        %1125 = vst [vmem:[%s294 + $0xa0] sm:$0xff] %v1093
        %1126 = vst [vmem:[%s294 + $0xa8] sm:$0xff] %v1094
        %1127 = vst [vmem:[%s294 + $0xb0] sm:$0xff] %v1095
        %1128 = vst [vmem:[%s294 + $0xb8] sm:$0xff] %v1096
        %1129 = vst [vmem:[%s294 + $0xc0] sm:$0xff] %v1097
        %1130 = vst [vmem:[%s294 + $0xc8] sm:$0xff] %v1098
        %1131 = vst [vmem:[%s294 + $0xd0] sm:$0xff] %v1099
        %1132 = vst [vmem:[%s294 + $0xd8] sm:$0xff] %v1100
        %1133 = vst [vmem:[%s294 + $0xe0] sm:$0xff] %v1101
        %1134 = vst [vmem:[%s294 + $0xe8] sm:$0xff] %v1102
        %1135 = vst [vmem:[%s294 + $0xf0] sm:$0xff] %v1103
        %1136 = vst [vmem:[%s294 + $0xf8] sm:$0xff] %v1104
        %v1138 = vsel %vm369, %v364, 0
        %v1141 = vsel %vm369, %v365, 0
        %1143 = vmatprep.subr.mxu0 0.0
        %1144 = vmatpush1.msra.mxu0 0.0
        %1145 = vmatprep.subr.mxu0 0.0
        %1146 = vmatpush1.msra.mxu0 0.0
        %1147 = vmatprep.subr.mxu0 0.0
        %1148 = vmatpush1.msra.mxu0 0.0
        %1149 = vmatprep.subr.mxu0 0.0
        %1150 = vmatpush1.msra.mxu0 0.0
        %1151 = vmatprep.subr.mxu0 0.0
        %1152 = vmatpush1.msra.mxu0 0.0
        %1153 = vmatprep.subr.mxu0 0.0
        %1154 = vmatpush1.msra.mxu0 0.0
        %1155 = vmatprep.subr.mxu0 0.0
        %1156 = vmatpush1.msra.mxu0 0.0
        %1157 = vmatprep.subr.mxu0 0.0
        %1158 = vmatpush1.msra.mxu0 0.0
        %1159 = vmatprep.subr.mxu0 0.0
        %1160 = vmatpush1.msra.mxu0 0.0
        %1161 = vmatprep.subr.mxu0 0.0
        %1162 = vmatpush1.msra.mxu0 0.0
        %1163 = vmatprep.subr.mxu0 0.0
        %1164 = vmatpush1.msra.mxu0 0.0
        %1165 = vmatprep.subr.mxu0 0.0
        %1166 = vmatpush1.msra.mxu0 0.0
        %1167 = vmatprep.subr.mxu0 0.0
        %1168 = vmatpush1.msra.mxu0 0.0
        %1169 = vmatprep.subr.mxu0 0.0
        %1170 = vmatpush1.msra.mxu0 0.0
        %1171 = vmatprep.subr.mxu0 0.0
        %1172 = vmatpush1.msra.mxu0 0.0
        %1173 = vmatprep.subr.mxu0 0.0
        %1174 = vmatpush1.msra.mxu0 %v712
        %1175 = vmatprep.subr.mxu0 0.0
        %1176 = vmatpush2.msra.mxu0 0.0
        %1177 = vmatprep.subr.mxu0 0.0
        %1178 = vmatpush2.msra.mxu0 0.0
        %1179 = vmatprep.subr.mxu0 0.0
        %1180 = vmatpush2.msra.mxu0 0.0
        %1181 = vmatprep.subr.mxu0 0.0
        %1182 = vmatpush2.msra.mxu0 0.0
        %1183 = vmatprep.subr.mxu0 0.0
        %1184 = vmatpush2.msra.mxu0 0.0
        %1185 = vmatprep.subr.mxu0 0.0
        %1186 = vmatpush2.msra.mxu0 0.0
        %1187 = vmatprep.subr.mxu0 0.0
        %1188 = vmatpush2.msra.mxu0 0.0
        %1189 = vmatprep.subr.mxu0 0.0
        %1190 = vmatpush2.msra.mxu0 0.0
        %1191 = vmatprep.subr.mxu0 0.0
        %1192 = vmatpush2.msra.mxu0 0.0
        %1193 = vmatprep.subr.mxu0 0.0
        %1194 = vmatpush2.msra.mxu0 0.0
        %1195 = vmatprep.subr.mxu0 0.0
        %1196 = vmatpush2.msra.mxu0 0.0
        %1197 = vmatprep.subr.mxu0 0.0
        %1198 = vmatpush2.msra.mxu0 0.0
        %1199 = vmatprep.subr.mxu0 0.0
        %1200 = vmatpush2.msra.mxu0 0.0
        %1201 = vmatprep.subr.mxu0 0.0
        %1202 = vmatpush2.msra.mxu0 0.0
        %1203 = vmatprep.subr.mxu0 0.0
        %1204 = vmatpush2.msra.mxu0 0.0
        %1205 = vmatprep.subr.mxu0 0.0
        %1206 = vmatpush2.msra.mxu0 0.0
        %1207 = vmatprep.mubr.f32.mxu0 0.0
        %1208 = vmatmul.mubr.f32.gmra.mxu0 %v1138
        %v1209 = vpop.f32.mrf.mxu0
        %v1210 = vadd.f32 0.0, %v1209
        %v1211 = vpop.f32.mrf.mxu0
        %1212 = vmatprep.mubr.f32.mxu0 0.0
        %1213 = vmatmul.mubr.f32.gmra.mxu0 %v1141
        %v1214 = vpop.f32.mrf.mxu0
        %v1215 = vadd.f32 0.0, %v1214
        %v1216 = vpop.f32.mrf.mxu0
        %1217 = vdwg.mxu0
        %v1218 = vadd.f32 %v703, %v1210
        %v1219 = vadd.f32 %v708, %v1215
        %v1220 = vadd.f32 %v1218, %v975
        %v1221 = vadd.f32 %v1219, %v975
        %vm1222 = vcmp.ge.f32.partialorder %v1220, 0.0
        %vm1223 = vcmp.ge.f32.partialorder %v1221, 0.0
        %v1224 = vmul.f32 %v1220, 0.2
        %v1225 = vmul.f32 %v1221, 0.2
        %v1226 = vsel %vm1222, %v1220, %v1224
        %v1227 = vsel %vm1223, %v1221, %v1225
        %1228 = vst [vmem:[%s294 + $0x100] sm:$0xff] %v1226
        %1229 = vst [vmem:[%s294 + $0x108] sm:$0xff] %v1227
        %s1230 = sand.u32 %s164, 1
        %s1231 = scalar_lea.sflag [#allocation3], %s1230
        %s1232 = sand.u32 %s164, 1
        %s1233 = smul.addr %s1232, 272
        %s1234 = scalar_lea.vmem [#allocation2], %s1233
        // Predicated region
        $region41: #{tpu_custom_call.1} parent=39 // pred_check
          %p1235 = pneg %p174
        $region42: #{tpu_custom_call.1} parent=39 // pred_check_branch
          %1237 = sbr.rel (%p1235) target = $region44
        $region43: #{tpu_custom_call.1} parent=39 // pred_region
          %s1238 = smul.u32 34, %s24
          %s1240 = ssub.s32 4352, 4352
          %1241 = vsyncadd %s1231, %s1240
          %s1242 = smul.addr %s23, 34
          %s1243 = sadd.s32 %s1238, %s1242
          %s1244 = smul.addr %s1243, 128
          %s1245 = scalar_lea.hbm %s5, %s1244
          %s1246 = sshll.u32 %s1234, 4
          %s1247 = int_to_ptr.vmem [resolvable:$true] %s1246
          %1252 = dma.vmem_to_hbm [thread:$0]  %s1247, 4352, %s1245, %s1231, 128, 128, 8
        $region44: #{tpu_custom_call.1} parent=39 // pred_fallthru
          _
      $region40: #{tpu_custom_call.1} parent=5 // pred_fallthru
        _
      %p1253 = scmp.le.s32.totalorder 2, %s14
      // Predicated region
      $region45: #{tpu_custom_call.1} parent=5 // pred_check
        %p1254 = pneg %p1253
      $region46: #{tpu_custom_call.1} parent=5 // pred_check_branch
        %1256 = sbr.rel (%p1254) target = $region48
      $region47: #{tpu_custom_call.1} parent=5 // pred_region
        %s1257 = ssub.s32 %s14, 2
        // Predicated region
        $region49: #{tpu_custom_call.1} parent=47 // pred_check
          %p1258 = pneg %p180
        $region50: #{tpu_custom_call.1} parent=47 // pred_check_branch
          %1260 = sbr.rel (%p1258) target = $region52
        $region51: #{tpu_custom_call.1} parent=47 // pred_region
          %s1261 = sand.u32 %s165, 1
          %s1262 = scalar_lea.sflag [#allocation3], %s1261
          %s1263 = sand.u32 %s165, 1
          %s1264 = smul.addr %s1263, 272
          %s1265 = scalar_lea.vmem [#allocation2], %s1264
          %1266 = dma.done %s1262, 4352
        $region52: #{tpu_custom_call.1} parent=47 // pred_fallthru
          _
      $region48: #{tpu_custom_call.1} parent=5 // pred_fallthru
        _
    $region6: #{tpu_custom_call.1} parent=1 // loop_footer
      %s18 = sadd.s32 1, %s14
    $region7: #{tpu_custom_call.1} parent=1 // loop_footer_branch
      %13 = sbr.rel target = $region3
    $region8: #{tpu_custom_call.1} parent=1 // loop_exit
      _
    %1267 = vsyncpa [#allocation3], 1
    %s1268 = scalar_lea.sflag [#allocation3], 1
    %1269 = vsyncpa %s1268, 1

</llo_original>
